<compile_context>
chip_gen: v7x
topology: tpu7x:2x2x1
jax: 0.10.0
libtpu: 0.0.40
codegen_flags: <defaults>
</compile_context>

<pallas_src>
import functools

import jax
import jax.numpy as jnp
from jax.experimental import pallas as pl
from jax.experimental.pallas import tpu as pltpu


def _round_up(x, m):
    return (x + m - 1) // m * m


def _fcnet_fused_kernel(*refs):
    """refs = (x_ref, w0_ref, b0_ref, w1_ref, b1_ref, ..., o_ref).

    x_ref: (tm, D0) at true feature width; w_i: (Din_i, Doutp_i); b_i:
    (1, Doutp_i); o_ref: (tm, DLp).  Output feature dims are padded to
    multiples of 128; padding columns stay exactly zero through every layer
    (zero weight columns, zero bias, ReLU(0) = 0).
    """
    x_ref = refs[0]
    o_ref = refs[-1]
    layer_refs = refs[1:-1]
    n_layers = len(layer_refs) // 2

    # Unrolled at trace time (fine for shallow stacks); activation stays
    # resident in VMEM/vregs across layers.
    h = x_ref[...].astype(jnp.float32)
    for i in range(n_layers):
        w = layer_refs[2 * i][...]
        b = layer_refs[2 * i + 1][...].astype(jnp.float32)
        # Cast h to the (possibly bf16) weight dtype for the MXU; accumulate f32.
        y = jnp.dot(h.astype(w.dtype), w, preferred_element_type=jnp.float32)
        h = jnp.maximum(y + b, 0.0)
    o_ref[...] = h.astype(o_ref.dtype)


def _fcnet_pallas(x_in, weights_pad, biases_pad, *, tm):
    n_pad, d0 = x_in.shape
    d_last_p = weights_pad[-1].shape[1]
    grid = (n_pad // tm,)

    # Input at true feature width (lane dim == full array dim is legal);
    # weights/biases are grid-invariant and stay VMEM-resident.
    in_specs = [pl.BlockSpec((tm, d0), lambda i: (i, 0))]
    flat_params = []
    for w, b in zip(weights_pad, biases_pad):
        din_p, dout_p = w.shape
        in_specs.append(pl.BlockSpec((din_p, dout_p), lambda i: (0, 0)))
        in_specs.append(pl.BlockSpec((1, dout_p), lambda i: (0, 0)))
        flat_params.append(w)
        flat_params.append(b)

    return pl.pallas_call(
        _fcnet_fused_kernel,
        out_shape=jax.ShapeDtypeStruct((n_pad, d_last_p), x_in.dtype),
        grid=grid,
        in_specs=in_specs,
        # Lane-dense (128-wide) output store; true width sliced in the wrapper.
        out_specs=pl.BlockSpec((tm, d_last_p), lambda i: (i, 0)),
        compiler_params=pltpu.CompilerParams(
            dimension_semantics=("parallel",),
            vmem_limit_bytes=48 * 1024 * 1024,
        ),
    )(x_in, *flat_params)


def init_fcnet_params(key, dims, bias=True):
    """Deterministic params mirroring weight_norm(nn.Linear(in, out), dim=None).

    Returns a list of (v, g, b); v is (out_dim, in_dim) like PyTorch, g is the
    scalar weight_norm gain (= ||v||_F at init), b is (out_dim,).
    """
    params = []
    for i in range(len(dims) - 1):
        in_dim, out_dim = dims[i], dims[i + 1]
        key, kw, kb = jax.random.split(key, 3)
        bound = 1.0 / jnp.sqrt(in_dim)
        v = jax.random.uniform(kw, (out_dim, in_dim), jnp.float32, -bound, bound)
        g = jnp.linalg.norm(v)  # scalar, weight_norm(dim=None) init
        b = (
            jax.random.uniform(kb, (out_dim,), jnp.float32, -bound, bound)
            if bias
            else jnp.zeros((out_dim,), jnp.float32)
        )
        params.append((v, g, b))
    return params


def prepare_fcnet_params(params, param_dtype=jnp.float32):
    """One-time prep (must be re-run after any training update):

      * fold the weight_norm scale g / ||V||_F into the weights,
      * transpose to (D_in, D_out),
      * zero-pad OUTPUT feature dims to multiples of 128 (lane-dense stores);
        the first layer's input rows stay at their true width (matches the
        unpadded x), later layers' rows match the previous padded width,
      * optionally store weights in bf16 (recommended for v6e/v7x once layer
        widths grow past ~128); biases stay f32 (added in f32 in-kernel).
    """
    weights_pad, biases_pad = [], []
    for li, (v, g, b) in enumerate(params):
        w_eff = (g / jnp.linalg.norm(v)) * v            # (out, in), f32
        w_t = w_eff.T.astype(jnp.float32)               # (in, out)
        din, dout = w_t.shape
        din_p = din if li == 0 else _round_up(din, 128)
        dout_p = _round_up(dout, 128)
        w_pad = jnp.zeros((din_p, dout_p), jnp.float32).at[:din, :dout].set(w_t)
        b_pad = jnp.zeros((1, dout_p), jnp.float32).at[0, :dout].set(
            b.astype(jnp.float32)
        )
        weights_pad.append(w_pad.astype(param_dtype))
        biases_pad.append(b_pad)
    return weights_pad, biases_pad


@functools.partial(jax.jit, static_argnames=("out_dim",))
def fcnet_forward(x, weights_pad, biases_pad, out_dim):
    """FCNet forward on pre-folded params. Dropout=0 => identity."""
    n, d0 = x.shape
    assert weights_pad[0].shape[0] == d0, "first-layer rows must match x width"

    # Batch (sublane) tiling: small batches run as a single grid step; large
    # batches use up to 512-row tiles (amortize the ~0.35 us per-step overhead)
    # while keeping >= 2 grid steps so v7x's two TensorCores both get work.
    n8 = _round_up(n, 8)
    if n8 <= 128:
        tm = n8
        n_pad = n8
    else:
        tm = 512
        while tm > 128 and _round_up(n8, tm) // tm < 2:
            tm //= 2
        n_pad = _round_up(n8, tm)

    # Only pad batch rows; never materialize a feature-padded copy of x.
    x_in = x if n_pad == n else jnp.zeros((n_pad, d0), x.dtype).at[:n, :].set(x)
    out_pad = _fcnet_pallas(x_in, weights_pad, biases_pad, tm=tm)
    return out_pad[:n, :out_dim]


def fcnet_reference(x, params):
    """Pure-JAX reference for correctness checking."""
    h = x
    for v, g, b in params:
        w_eff = (g / jnp.linalg.norm(v)) * v
        h = jnp.maximum(h @ w_eff.T + b, 0.0)
    return h


if __name__ == "__main__":
    key = jax.random.PRNGKey(0)
    kx, kp, kx2 = jax.random.split(key, 3)

    # FCNet(dims=[32, 64, 32]): one hidden weight-norm Linear+ReLU, one final.
    dims = [32, 64, 32]
    params = init_fcnet_params(kp, dims, bias=True)

    # One-time parameter prep (outside the forward hot path).
    weights_pad, biases_pad = prepare_fcnet_params(params)

    # Small batch: single grid step.
    batch = 8
    x = jax.random.normal(kx, (batch, dims[0]), jnp.float32)
    out = fcnet_forward(x, weights_pad, biases_pad, dims[-1])
    jax.block_until_ready(out)
    ref = fcnet_reference(x, params)
    assert out.shape == (batch, dims[-1])
    assert jnp.allclose(out, ref, atol=1e-4, rtol=1e-4), "mismatch (batch=8)"

    # Larger batch: exercises the multi-step "parallel" grid (2 x 512-row tiles).
    batch2 = 1024
    x2 = jax.random.normal(kx2, (batch2, dims[0]), jnp.float32)
    out2 = fcnet_forward(x2, weights_pad, biases_pad, dims[-1])
    jax.block_until_ready(out2)
    ref2 = fcnet_reference(x2, params)
    assert out2.shape == (batch2, dims[-1])
    assert jnp.allclose(out2, ref2, atol=1e-4, rtol=1e-4), "mismatch (batch=1024)"

    print("KERNEL_OK")
</pallas_src>

<mosaic_0001>
module attributes {stable_mosaic.version = 11 : i64} {
  func.func @_fcnet_fused_kernel(%arg0: i32, %arg1: memref<8x32xf32, #tpu.memory_space<vmem>>, %arg2: memref<32x128xf32, #tpu.memory_space<vmem>>, %arg3: memref<1x128xf32, #tpu.memory_space<vmem>>, %arg4: memref<128x128xf32, #tpu.memory_space<vmem>>, %arg5: memref<1x128xf32, #tpu.memory_space<vmem>>, %arg6: memref<8x128xf32, #tpu.memory_space<vmem>>) attributes {dimension_semantics = [#tpu.dimension_semantics<parallel>], iteration_bounds = array<i64: 1>, scalar_prefetch = 0 : i64, scratch_operands = 0 : i64, tpu.core_type = #tpu.core_type<tc>, window_params = [{transform_indices = @transform_0, window_bounds = array<i64: 8, 32>}, {pipeline_mode = #tpu.pipeline_mode<synchronous>, transform_indices = @transform_1, window_bounds = array<i64: 32, 128>}, {pipeline_mode = #tpu.pipeline_mode<synchronous>, transform_indices = @transform_2, window_bounds = array<i64: 1, 128>}, {pipeline_mode = #tpu.pipeline_mode<synchronous>, transform_indices = @transform_3, window_bounds = array<i64: 128, 128>}, {pipeline_mode = #tpu.pipeline_mode<synchronous>, transform_indices = @transform_4, window_bounds = array<i64: 1, 128>}, {transform_indices = @transform_5, window_bounds = array<i64: 8, 128>}]} {
    %c0 = arith.constant 0 : index
    %c0_0 = arith.constant 0 : index
    %0 = vector.load %arg1[%c0, %c0_0] : memref<8x32xf32, #tpu.memory_space<vmem>>, vector<8x32xf32>
    %c0_1 = arith.constant 0 : index
    %c0_2 = arith.constant 0 : index
    %1 = vector.load %arg2[%c0_1, %c0_2] : memref<32x128xf32, #tpu.memory_space<vmem>>, vector<32x128xf32>
    %c0_3 = arith.constant 0 : index
    %c0_4 = arith.constant 0 : index
    %2 = vector.load %arg3[%c0_3, %c0_4] : memref<1x128xf32, #tpu.memory_space<vmem>>, vector<1x128xf32>
    %cst = arith.constant dense<0.000000e+00> : vector<8x128xf32>
    %3 = tpu.matmul %0, %1, %cst {dimension_numbers = #tpu.dot_dimension_numbers<[1], [0], [0], [1], [0, 0, 1, 1], [], []>} : vector<8x32xf32>, vector<32x128xf32>, vector<8x128xf32> -> vector<8x128xf32>
    %4 = vector.broadcast %2 : vector<1x128xf32> to vector<8x128xf32>
    %5 = arith.addf %3, %4 : vector<8x128xf32>
    %cst_5 = arith.constant 0.000000e+00 : f32
    %6 = vector.broadcast %cst_5 : f32 to vector<8x128xf32>
    %7 = arith.maximumf %5, %6 : vector<8x128xf32>
    %c0_6 = arith.constant 0 : index
    %c0_7 = arith.constant 0 : index
    %8 = vector.load %arg4[%c0_6, %c0_7] : memref<128x128xf32, #tpu.memory_space<vmem>>, vector<128x128xf32>
    %c0_8 = arith.constant 0 : index
    %c0_9 = arith.constant 0 : index
    %9 = vector.load %arg5[%c0_8, %c0_9] : memref<1x128xf32, #tpu.memory_space<vmem>>, vector<1x128xf32>
    %cst_10 = arith.constant dense<0.000000e+00> : vector<8x128xf32>
    %10 = tpu.matmul %7, %8, %cst_10 {dimension_numbers = #tpu.dot_dimension_numbers<[1], [0], [0], [1], [0, 0, 1, 1], [], []>} : vector<8x128xf32>, vector<128x128xf32>, vector<8x128xf32> -> vector<8x128xf32>
    %11 = vector.broadcast %9 : vector<1x128xf32> to vector<8x128xf32>
    %12 = arith.addf %10, %11 : vector<8x128xf32>
    %cst_11 = arith.constant 0.000000e+00 : f32
    %13 = vector.broadcast %cst_11 : f32 to vector<8x128xf32>
    %14 = arith.maximumf %12, %13 : vector<8x128xf32>
    %c0_12 = arith.constant 0 : index
    %c0_13 = arith.constant 0 : index
    %15 = vector.load %arg6[%c0_12, %c0_13] : memref<8x128xf32, #tpu.memory_space<vmem>>, vector<8x128xf32>
    tpu.vector_store %arg6[%c0_12, %c0_13], %14 {strides = array<i32>} : memref<8x128xf32, #tpu.memory_space<vmem>>, vector<8x128xf32>,
    return
  }
  func.func @transform_0(%arg0: i32) -> (i32, i32) {
    %c0_i32 = arith.constant 0 : i32
    %c0_i32_0 = arith.constant 0 : i32
    return %arg0, %c0_i32 : i32, i32
  }
  func.func @transform_1(%arg0: i32) -> (i32, i32) {
    %c0_i32 = arith.constant 0 : i32
    %c0_i32_0 = arith.constant 0 : i32
    %c0_i32_1 = arith.constant 0 : i32
    return %c0_i32, %c0_i32_0 : i32, i32
  }
  func.func @transform_2(%arg0: i32) -> (i32, i32) {
    %c0_i32 = arith.constant 0 : i32
    %c0_i32_0 = arith.constant 0 : i32
    %c0_i32_1 = arith.constant 0 : i32
    return %c0_i32, %c0_i32_0 : i32, i32
  }
  func.func @transform_3(%arg0: i32) -> (i32, i32) {
    %c0_i32 = arith.constant 0 : i32
    %c0_i32_0 = arith.constant 0 : i32
    %c0_i32_1 = arith.constant 0 : i32
    return %c0_i32, %c0_i32_0 : i32, i32
  }
  func.func @transform_4(%arg0: i32) -> (i32, i32) {
    %c0_i32 = arith.constant 0 : i32
    %c0_i32_0 = arith.constant 0 : i32
    %c0_i32_1 = arith.constant 0 : i32
    return %c0_i32, %c0_i32_0 : i32, i32
  }
  func.func @transform_5(%arg0: i32) -> (i32, i32) {
    %c0_i32 = arith.constant 0 : i32
    %c0_i32_0 = arith.constant 0 : i32
    return %arg0, %c0_i32 : i32, i32
  }
}

</mosaic_0001>

<llo_original>
// kernel: fcnet_forward.1
$region0: #{fcnet_forward.1}
  #allocation0 [shape = 'u32[]', space=smem, size = 0x4, offset = 0x4, fixed_abs, tag = 'smem constant byte address 0x4 - core index']
  #allocation1 [shape = 'u32[144,128]{1,0:T(1,128)}', space=vmem, size = 0x12000, scoped, tag = 'internal scratch']
  %s0 = inlined_call_operand.hbm [shape: f32[8,32], index: 0, kind: input, shape index: {}]
  %s1 = inlined_call_operand.hbm [shape: f32[32,128], index: 1, kind: input, shape index: {}]
  %s2 = inlined_call_operand.vmem [shape: f32[1,128], index: 2, kind: input, shape index: {}]
  %s3 = inlined_call_operand.hbm [shape: f32[128,128], index: 3, kind: input, shape index: {}]
  %s4 = inlined_call_operand.vmem [shape: f32[1,128], index: 4, kind: input, shape index: {}]
  %s5 = inlined_call_operand.hbm [shape: f32[8,128], index: 5, kind: output, shape index: {}]
  %s6 = sld [smem:[#allocation0]]
  $region42: #{fcnet_forward.1} parent=0
    _
  %s8 = ssub.s32 1, %s6
  %s9 = scalar_select 0, %s8, %s6
  $region1: #{fcnet_forward.1} parent=0
    #allocation2 [shape = 'u8[4096]{0}', space=vmem, size = 0x1000, scoped, tag = 'input window, operand 0, single buffered']
    #allocation3 [shape = 's32[1]{0}', space=sflag, size = 0x4, scoped, tag = 'scoped memory for fcnet_forward.1']
    #allocation4 [shape = 's32[1]{0}', space=sflag, size = 0x4, scoped, tag = 'scoped memory for fcnet_forward.1']
    #allocation5 [shape = 'u8[16384]{0}', space=vmem, size = 0x4000, scoped, tag = 'input window, operand 1, single buffered']
    #allocation6 [shape = 's32[1]{0}', space=sflag, size = 0x4, scoped, tag = 'scoped memory for fcnet_forward.1']
    #allocation7 [shape = 'u8[65536]{0}', space=vmem, size = 0x10000, scoped, tag = 'input window, operand 3, single buffered']
    #allocation8 [shape = 'u8[4096]{0}', space=vmem, size = 0x1000, scoped, tag = 'output window, operand 0, single buffered']
    %10 = vsyncpa [#allocation3], 0
    %11 = vsyncpa [#allocation6], 0
    %12 = vsyncpa [#allocation4], 0
    // Predicated region
    $region2: #{fcnet_forward.1} parent=1 // pred_check
      _
    $region3: #{fcnet_forward.1} parent=1 // pred_check_branch
      %14 = sbr.rel (0) target = $region5
    $region4: #{fcnet_forward.1} parent=1 // pred_region
      %s16 = ssub.s32 128, 128
      %17 = vsyncadd [#allocation3], %s16
      %s19 = sshll.u32 [#allocation2], 4
      %s20 = int_to_ptr.vmem [resolvable:$true] %s19
      %22 = dma.hbm_to_vmem [thread:$0]  %s0, 128, %s20, [#allocation3]
    $region5: #{fcnet_forward.1} parent=1 // pred_fallthru
      _
    // Predicated region
    $region6: #{fcnet_forward.1} parent=1 // pred_check
      _
    $region7: #{fcnet_forward.1} parent=1 // pred_check_branch
      %24 = sbr.rel (0) target = $region9
    $region8: #{fcnet_forward.1} parent=1 // pred_region
      %s26 = ssub.s32 512, 512
      %27 = vsyncadd [#allocation6], %s26
      %s28 = sshll.u32 [#allocation5], 4
      %s29 = int_to_ptr.vmem [resolvable:$true] %s28
      %34 = dma.hbm_to_vmem [thread:$0]  %s1, 512, %s29, [#allocation6], 128, 128, 8
    $region9: #{fcnet_forward.1} parent=1 // pred_fallthru
      _
    // Predicated region
    $region10: #{fcnet_forward.1} parent=1 // pred_check
      _
    $region11: #{fcnet_forward.1} parent=1 // pred_check_branch
      %36 = sbr.rel (0) target = $region13
    $region12: #{fcnet_forward.1} parent=1 // pred_region
      _
    $region13: #{fcnet_forward.1} parent=1 // pred_fallthru
      _
    // Predicated region
    $region14: #{fcnet_forward.1} parent=1 // pred_check
      _
    $region15: #{fcnet_forward.1} parent=1 // pred_check_branch
      %38 = sbr.rel (0) target = $region17
    $region16: #{fcnet_forward.1} parent=1 // pred_region
      %s40 = ssub.s32 2048, 2048
      %41 = vsyncadd [#allocation6], %s40
      %s42 = sshll.u32 [#allocation7], 4
      %s43 = int_to_ptr.vmem [resolvable:$true] %s42
      %48 = dma.hbm_to_vmem [thread:$0]  %s3, 2048, %s43, [#allocation6], 128, 128, 8
    $region17: #{fcnet_forward.1} parent=1 // pred_fallthru
      _
    // Predicated region
    $region18: #{fcnet_forward.1} parent=1 // pred_check
      _
    $region19: #{fcnet_forward.1} parent=1 // pred_check_branch
      %50 = sbr.rel (0) target = $region21
    $region20: #{fcnet_forward.1} parent=1 // pred_region
      _
    $region21: #{fcnet_forward.1} parent=1 // pred_fallthru
      _
    // Predicated region
    $region22: #{fcnet_forward.1} parent=1 // pred_check
      _
    $region23: #{fcnet_forward.1} parent=1 // pred_check_branch
      %52 = sbr.rel (0) target = $region25
    $region24: #{fcnet_forward.1} parent=1 // pred_region
      %53 = dma.done [#allocation3], 128
    $region25: #{fcnet_forward.1} parent=1 // pred_fallthru
      _
    // Predicated region
    $region26: #{fcnet_forward.1} parent=1 // pred_check
      _
    $region27: #{fcnet_forward.1} parent=1 // pred_check_branch
      %55 = sbr.rel (0) target = $region29
    $region28: #{fcnet_forward.1} parent=1 // pred_region
      %56 = dma.done [#allocation6], 512
    $region29: #{fcnet_forward.1} parent=1 // pred_fallthru
      _
    // Predicated region
    $region30: #{fcnet_forward.1} parent=1 // pred_check
      _
    $region31: #{fcnet_forward.1} parent=1 // pred_check_branch
      %58 = sbr.rel (0) target = $region33
    $region32: #{fcnet_forward.1} parent=1 // pred_region
      %59 = dma.done [#allocation6], 2048
    $region33: #{fcnet_forward.1} parent=1 // pred_fallthru
      _
    %v60 = vld [vmem:[#allocation2] sm:$0xff]
    %v61 = vld [vmem:[#allocation5] sm:$0xff]
    %v62 = vld [vmem:[#allocation5 + $0x8] sm:$0xff]
    %v63 = vld [vmem:[#allocation5 + $0x10] sm:$0xff]
    %v64 = vld [vmem:[#allocation5 + $0x18] sm:$0xff]
    %v65 = vld [vmem:[%s2] sm:$0x1]
    %v67 = vlaneseq
    %v68 = vshrl.u32 %v67, 7
    %v69 = vsub.s32 0, %v68
    %v70 = vrot.slane %v65, %v69
    %vm72 = vcmask 261120
    %v74 = vsel %vm72, %v60, 0
    %76 = vmatprep.subr.mxu0 0.0
    %77 = vmatpush1.msra.mxu0 %v61
    %78 = vmatprep.subr.mxu0 0.0
    %79 = vmatpush1.msra.mxu0 %v62
    %80 = vmatprep.subr.mxu0 0.0
    %81 = vmatpush1.msra.mxu0 %v63
    %82 = vmatprep.subr.mxu0 0.0
    %83 = vmatpush1.msra.mxu0 %v64
    %84 = vmatprep.subr.mxu0 0.0
    %85 = vmatpush1.msra.mxu0 0.0
    %86 = vmatprep.subr.mxu0 0.0
    %87 = vmatpush1.msra.mxu0 0.0
    %88 = vmatprep.subr.mxu0 0.0
    %89 = vmatpush1.msra.mxu0 0.0
    %90 = vmatprep.subr.mxu0 0.0
    %91 = vmatpush1.msra.mxu0 0.0
    %92 = vmatprep.subr.mxu0 0.0
    %93 = vmatpush1.msra.mxu0 0.0
    %94 = vmatprep.subr.mxu0 0.0
    %95 = vmatpush1.msra.mxu0 0.0
    %96 = vmatprep.subr.mxu0 0.0
    %97 = vmatpush1.msra.mxu0 0.0
    %98 = vmatprep.subr.mxu0 0.0
    %99 = vmatpush1.msra.mxu0 0.0
    %100 = vmatprep.subr.mxu0 0.0
    %101 = vmatpush1.msra.mxu0 0.0
    %102 = vmatprep.subr.mxu0 0.0
    %103 = vmatpush1.msra.mxu0 0.0
    %104 = vmatprep.subr.mxu0 0.0
    %105 = vmatpush1.msra.mxu0 0.0
    %106 = vmatprep.subr.mxu0 0.0
    %107 = vmatpush1.msra.mxu0 0.0
    %108 = vmatprep.subr.mxu0 0.0
    %109 = vmatpush1.msra.mxu0 0.0
    %110 = vmatprep.subr.mxu0 0.0
    %111 = vmatpush1.msra.mxu0 0.0
    %112 = vmatprep.subr.mxu0 0.0
    %113 = vmatpush1.msra.mxu0 0.0
    %114 = vmatprep.subr.mxu0 0.0
    %115 = vmatpush1.msra.mxu0 0.0
    %116 = vmatprep.subr.mxu0 0.0
    %117 = vmatpush1.msra.mxu0 0.0
    %118 = vmatprep.subr.mxu0 0.0
    %119 = vmatpush1.msra.mxu0 0.0
    %120 = vmatprep.subr.mxu0 0.0
    %121 = vmatpush1.msra.mxu0 0.0
    %122 = vmatprep.subr.mxu0 0.0
    %123 = vmatpush1.msra.mxu0 0.0
    %124 = vmatprep.subr.mxu0 0.0
    %125 = vmatpush1.msra.mxu0 0.0
    %126 = vmatprep.subr.mxu0 0.0
    %127 = vmatpush1.msra.mxu0 0.0
    %128 = vmatprep.subr.mxu0 0.0
    %129 = vmatpush1.msra.mxu0 0.0
    %130 = vmatprep.subr.mxu0 0.0
    %131 = vmatpush1.msra.mxu0 0.0
    %132 = vmatprep.subr.mxu0 0.0
    %133 = vmatpush1.msra.mxu0 0.0
    %134 = vmatprep.subr.mxu0 0.0
    %135 = vmatpush1.msra.mxu0 0.0
    %136 = vmatprep.subr.mxu0 0.0
    %137 = vmatpush1.msra.mxu0 0.0
    %138 = vmatprep.subr.mxu0 0.0
    %139 = vmatpush1.msra.mxu0 0.0
    %140 = vmatprep.mubr.f32.mxu0 0.0
    %141 = vmatmul.mubr.f32.gmra.mrb[0].mxu0 %v74
    %v142 = vpop.f32.mrb[0].mxu0
    %v143 = vadd.f32 %v70, %v142
    %v144 = vpop.f32.mrb[0].mxu0
    %145 = vdwg.mxu0
    %v146 = vmax.f32 %v143, 0.0
    %v147 = vld [vmem:[#allocation7] sm:$0xff]
    %v148 = vld [vmem:[#allocation7 + $0x8] sm:$0xff]
    %v149 = vld [vmem:[#allocation7 + $0x10] sm:$0xff]
    %v150 = vld [vmem:[#allocation7 + $0x18] sm:$0xff]
    %v151 = vld [vmem:[#allocation7 + $0x20] sm:$0xff]
    %v152 = vld [vmem:[#allocation7 + $0x28] sm:$0xff]
    %v153 = vld [vmem:[#allocation7 + $0x30] sm:$0xff]
    %v154 = vld [vmem:[#allocation7 + $0x38] sm:$0xff]
    %v155 = vld [vmem:[#allocation7 + $0x40] sm:$0xff]
    %v156 = vld [vmem:[#allocation7 + $0x48] sm:$0xff]
    %v157 = vld [vmem:[#allocation7 + $0x50] sm:$0xff]
    %v158 = vld [vmem:[#allocation7 + $0x58] sm:$0xff]
    %v159 = vld [vmem:[#allocation7 + $0x60] sm:$0xff]
    %v160 = vld [vmem:[#allocation7 + $0x68] sm:$0xff]
    %v161 = vld [vmem:[#allocation7 + $0x70] sm:$0xff]
    %v162 = vld [vmem:[#allocation7 + $0x78] sm:$0xff]
    %v163 = vld [vmem:[%s4] sm:$0x1]
    %v165 = vlaneseq
    %v166 = vshrl.u32 %v165, 7
    %v167 = vsub.s32 0, %v166
    %v168 = vrot.slane %v163, %v167
    %170 = vmatprep.subr.mxu0 0.0
    %171 = vmatpush1.msra.mxu0 %v147
    %172 = vmatprep.subr.mxu0 0.0
    %173 = vmatpush1.msra.mxu0 %v148
    %174 = vmatprep.subr.mxu0 0.0
    %175 = vmatpush1.msra.mxu0 %v149
    %176 = vmatprep.subr.mxu0 0.0
    %177 = vmatpush1.msra.mxu0 %v150
    %178 = vmatprep.subr.mxu0 0.0
    %179 = vmatpush1.msra.mxu0 %v151
    %180 = vmatprep.subr.mxu0 0.0
    %181 = vmatpush1.msra.mxu0 %v152
    %182 = vmatprep.subr.mxu0 0.0
    %183 = vmatpush1.msra.mxu0 %v153
    %184 = vmatprep.subr.mxu0 0.0
    %185 = vmatpush1.msra.mxu0 %v154
    %186 = vmatprep.subr.mxu0 0.0
    %187 = vmatpush1.msra.mxu0 %v155
    %188 = vmatprep.subr.mxu0 0.0
    %189 = vmatpush1.msra.mxu0 %v156
    %190 = vmatprep.subr.mxu0 0.0
    %191 = vmatpush1.msra.mxu0 %v157
    %192 = vmatprep.subr.mxu0 0.0
    %193 = vmatpush1.msra.mxu0 %v158
    %194 = vmatprep.subr.mxu0 0.0
    %195 = vmatpush1.msra.mxu0 %v159
    %196 = vmatprep.subr.mxu0 0.0
    %197 = vmatpush1.msra.mxu0 %v160
    %198 = vmatprep.subr.mxu0 0.0
    %199 = vmatpush1.msra.mxu0 %v161
    %200 = vmatprep.subr.mxu0 0.0
    %201 = vmatpush1.msra.mxu0 %v162
    %202 = vmatprep.subr.mxu0 0.0
    %203 = vmatpush1.msra.mxu0 0.0
    %204 = vmatprep.subr.mxu0 0.0
    %205 = vmatpush1.msra.mxu0 0.0
    %206 = vmatprep.subr.mxu0 0.0
    %207 = vmatpush1.msra.mxu0 0.0
    %208 = vmatprep.subr.mxu0 0.0
    %209 = vmatpush1.msra.mxu0 0.0
    %210 = vmatprep.subr.mxu0 0.0
    %211 = vmatpush1.msra.mxu0 0.0
    %212 = vmatprep.subr.mxu0 0.0
    %213 = vmatpush1.msra.mxu0 0.0
    %214 = vmatprep.subr.mxu0 0.0
    %215 = vmatpush1.msra.mxu0 0.0
    %216 = vmatprep.subr.mxu0 0.0
    %217 = vmatpush1.msra.mxu0 0.0
    %218 = vmatprep.subr.mxu0 0.0
    %219 = vmatpush1.msra.mxu0 0.0
    %220 = vmatprep.subr.mxu0 0.0
    %221 = vmatpush1.msra.mxu0 0.0
    %222 = vmatprep.subr.mxu0 0.0
    %223 = vmatpush1.msra.mxu0 0.0
    %224 = vmatprep.subr.mxu0 0.0
    %225 = vmatpush1.msra.mxu0 0.0
    %226 = vmatprep.subr.mxu0 0.0
    %227 = vmatpush1.msra.mxu0 0.0
    %228 = vmatprep.subr.mxu0 0.0
    %229 = vmatpush1.msra.mxu0 0.0
    %230 = vmatprep.subr.mxu0 0.0
    %231 = vmatpush1.msra.mxu0 0.0
    %232 = vmatprep.subr.mxu0 0.0
    %233 = vmatpush1.msra.mxu0 0.0
    %234 = vmatprep.mubr.f32.mxu0 0.0
    %235 = vmatmul.mubr.f32.gmra.mrb[0].mxu0 %v146
    %v236 = vpop.f32.mrb[0].mxu0
    %v237 = vadd.f32 %v168, %v236
    %v238 = vpop.f32.mrb[0].mxu0
    %239 = vdwg.mxu0
    %v240 = vmax.f32 %v237, 0.0
    %241 = vst [vmem:[#allocation8] sm:$0xff] %v240
    // Predicated region
    $region34: #{fcnet_forward.1} parent=1 // pred_check
      _
    $region35: #{fcnet_forward.1} parent=1 // pred_check_branch
      %243 = sbr.rel (0) target = $region37
    $region36: #{fcnet_forward.1} parent=1 // pred_region
      %s245 = ssub.s32 128, 128
      %246 = vsyncadd [#allocation4], %s245
      %s248 = sshll.u32 [#allocation8], 4
      %s249 = int_to_ptr.vmem [resolvable:$true] %s248
      %251 = dma.vmem_to_hbm [thread:$0]  %s249, 128, %s5, [#allocation4]
    $region37: #{fcnet_forward.1} parent=1 // pred_fallthru
      _
    // Predicated region
    $region38: #{fcnet_forward.1} parent=1 // pred_check
      _
    $region39: #{fcnet_forward.1} parent=1 // pred_check_branch
      %253 = sbr.rel (0) target = $region41
    $region40: #{fcnet_forward.1} parent=1 // pred_region
      %254 = dma.done [#allocation4], 128
    $region41: #{fcnet_forward.1} parent=1 // pred_fallthru
      _
    %255 = vsyncpa [#allocation3], 1
    %256 = vsyncpa [#allocation6], 1
    %257 = vsyncpa [#allocation4], 1

</llo_original>
